<compile_context>
chip_gen: v7x
topology: tpu7x:2x2x1
jax: 0.10.0
libtpu: 0.0.40
codegen_flags: <defaults>
</compile_context>

<pallas_src>
import jax
import jax.numpy as jnp
from jax.experimental import pallas as pl
from jax.experimental.pallas import tpu as pltpu


def _round_up(x, m):
    return ((x + m - 1) // m) * m


def _largest_divisor_leq(n, cap):
    cap = int(max(1, min(n, cap)))
    for d in range(cap, 0, -1):
        if n % d == 0:
            return d
    return 1


def _h_block_candidates(H, sub):
    """Divisors of H usable as a block height (multiple of `sub` or full H), descending."""
    return [d for d in range(H, 0, -1) if H % d == 0 and (d == H or d % sub == 0)]


def _vmem_capacity_bytes():
    try:
        info = pltpu.get_tpu_info()
        cap = getattr(info, "vmem_capacity_bytes", None)
        if cap:
            return int(cap)
    except Exception:
        pass
    return 64 * 1024 * 1024  # conservative (v7x-sized) fallback


def _rpp_kernel_general(x_ref, o_ref):
    # x_ref: (4, Bb, Cb, Hb, W)   the 4 batch-chunks stacked on the leading dim
    # o_ref: (Bb, Cb, Hb, 2*W)
    # Direct per-segment stores: no concatenate temporary, half the live values.
    W = x_ref.shape[-1]
    W2 = W // 2
    for j in range(4):
        first = x_ref[j, :, :, :, 0:W2]              # first half of chunk j
        second = x_ref[(j + 3) % 4, :, :, :, W2:W]   # second half of chunk (j-1)%4
        o_ref[:, :, :, j * W2:(j + 1) * W2] = first + second


def _rpp_kernel_aligned(a_ref, b_ref, o_ref):
    # a_ref, b_ref: (1, Bb, Cb, H, W2)  first / permuted-second half picked by BlockSpec
    # o_ref:        (Bb, Cb, H, W2)     output segment j picked by BlockSpec
    o_ref[...] = a_ref[0] + b_ref[0]


def reverse_patch_partition(x):
    """x: (4*Bo, C, H, W) NCHW, W even. Returns (Bo, C, H, 2*W)."""
    B, C, H, W = x.shape
    assert B % 4 == 0 and W % 2 == 0
    Bo = B // 4
    W2 = W // 2

    itemsize = jnp.dtype(x.dtype).itemsize
    sub = 8 * max(1, 4 // itemsize)      # sublane multiple (8 f32, 16 bf16, 32 int8)
    lane = 128

    vmem_cap = _vmem_capacity_bytes()
    # Double-buffered pipeline footprint budget; leave headroom below physical VMEM.
    pipeline_budget = min(48 * 1024 * 1024, int(vmem_cap * 0.7))
    per_step_budget = pipeline_budget // 2

    # Free reshape: split the batch dim into (4, Bo). No data movement.
    xr = x.reshape(4, Bo, C, H, W)
    out_shape = jax.ShapeDtypeStruct((Bo, C, H, 2 * W), x.dtype)
    cost = pl.CostEstimate(
        flops=2 * Bo * C * H * W,
        transcendentals=0,
        bytes_accessed=6 * Bo * C * H * W * itemsize,
    )

    if W2 % 128 == 0:
        # ---- Aligned path: half-split + (j-1)%4 permutation live in the index maps.
        hp = _round_up(H, sub)

        def blk_bytes_b(bb, cb):      # 2 input halves + 1 output block, lane-aligned
            return 3 * bb * cb * hp * W2 * itemsize

        Cb = _largest_divisor_leq(C, per_step_budget // max(1, blk_bytes_b(1, 1)))
        Bb = _largest_divisor_leq(Bo, per_step_budget // max(1, blk_bytes_b(1, Cb)))
        db_bytes = 2 * blk_bytes_b(Bb, Cb)
        vmem_limit = int(min(vmem_cap, max(32 * 1024 * 1024, db_bytes + (4 << 20))))

        grid = (4, Bo // Bb, C // Cb)   # segment axis gives >= 4 parallel steps
        return pl.pallas_call(
            _rpp_kernel_aligned,
            out_shape=out_shape,
            grid=grid,
            in_specs=[
                pl.BlockSpec((1, Bb, Cb, H, W2),
                             lambda j, b, c: (j, b, c, 0, 0)),
                pl.BlockSpec((1, Bb, Cb, H, W2),
                             lambda j, b, c: ((j + 3) % 4, b, c, 0, 1)),
            ],
            out_specs=pl.BlockSpec((Bb, Cb, H, W2),
                                   lambda j, b, c: (b, c, 0, j)),
            compiler_params=pltpu.CompilerParams(
                dimension_semantics=("parallel", "parallel", "parallel"),
                vmem_limit_bytes=vmem_limit,
            ),
            cost_estimate=cost,
        )(xr, xr)

    # ---- General path (small / unaligned W): blocks keep (H, W) as the last two dims,
    # which is tiling-legal for any H, W (full dims).  Padding-aware sizing below.
    win = _round_up(W, lane)
    wout = _round_up(2 * W, lane)

    def blk_bytes_a(bb, cb, hb):      # 4 stacked input chunks + 1 output block, padded
        hp = _round_up(hb, sub)
        return (4 * bb * cb * hp * win + bb * cb * hp * wout) * itemsize

    hcands = _h_block_candidates(H, sub)
    Hb = None
    for d in hcands:
        if blk_bytes_a(1, 1, d) <= per_step_budget:
            Hb = d
            break
    if Hb is None:
        Hb = hcands[-1]               # smallest legal block; vmem_limit bumped below

    Cb = _largest_divisor_leq(C, per_step_budget // max(1, blk_bytes_a(1, 1, Hb)))
    Bb = _largest_divisor_leq(Bo, per_step_budget // max(1, blk_bytes_a(1, Cb, Hb)))

    # Give the grid at least 2 steps when possible (keeps both v7x TensorCores busy).
    if (Bo // Bb) * (C // Cb) * (H // Hb) < 2:
        if C >= 2:
            Cb = _largest_divisor_leq(C, C // 2)
        elif Bo >= 2:
            Bb = _largest_divisor_leq(Bo, Bo // 2)
        else:
            for d in hcands:
                if d <= H // 2:
                    Hb = d
                    break

    db_bytes = 2 * blk_bytes_a(Bb, Cb, Hb)
    vmem_limit = int(min(vmem_cap, max(32 * 1024 * 1024, db_bytes + (4 << 20))))

    grid = (Bo // Bb, C // Cb, H // Hb)
    return pl.pallas_call(
        _rpp_kernel_general,
        out_shape=out_shape,
        grid=grid,
        in_specs=[
            pl.BlockSpec((4, Bb, Cb, Hb, W), lambda b, c, h: (0, b, c, h, 0)),
        ],
        out_specs=pl.BlockSpec((Bb, Cb, Hb, 2 * W), lambda b, c, h: (b, c, h, 0)),
        compiler_params=pltpu.CompilerParams(
            dimension_semantics=("parallel", "parallel", "parallel"),
            vmem_limit_bytes=vmem_limit,
        ),
        cost_estimate=cost,
    )(xr)


def _reference(x):
    """Pure-JAX mirror of the PyTorch forward for verification."""
    B, C, H, W = x.shape
    Bo, W2 = B // 4, W // 2
    chunks = [x[i * Bo:(i + 1) * Bo] for i in range(4)]
    x_0_0, x_1_1 = chunks[0][..., :W2], chunks[0][..., W2:]
    x_0_1, x_1_2 = chunks[1][..., :W2], chunks[1][..., W2:]
    x_0_2, x_1_3 = chunks[2][..., :W2], chunks[2][..., W2:]
    x_0_3, x_1_0 = chunks[3][..., :W2], chunks[3][..., W2:]
    x_0 = jnp.concatenate([x_0_0, x_0_1, x_0_2, x_0_3], axis=3)
    x_1 = jnp.concatenate([x_1_0, x_1_1, x_1_2, x_1_3], axis=3)
    return x_0 + x_1


if __name__ == "__main__":
    key = jax.random.PRNGKey(0)
    k1, k2 = jax.random.split(key)

    # Small-W path (the common ViT regime / demo shape). Batch must be a multiple of 4.
    x_small = jax.random.normal(k1, (8, 4, 16, 16), dtype=jnp.float32)
    out_small = jax.block_until_ready(reverse_patch_partition(x_small))
    assert out_small.shape == (2, 4, 16, 32), out_small.shape
    assert jnp.allclose(out_small, _reference(x_small), atol=1e-6, rtol=1e-6)

    # Lane-aligned path (W/2 % 128 == 0): half-split + permutation done in BlockSpecs.
    x_big = jax.random.normal(k2, (4, 2, 8, 256), dtype=jnp.float32)
    out_big = jax.block_until_ready(reverse_patch_partition(x_big))
    assert out_big.shape == (1, 2, 8, 512), out_big.shape
    assert jnp.allclose(out_big, _reference(x_big), atol=1e-6, rtol=1e-6)

    print("KERNEL_OK")
</pallas_src>

<mosaic_0001>
module attributes {stable_mosaic.version = 11 : i64} {
  func.func @_rpp_kernel_general(%arg0: i32, %arg1: i32, %arg2: i32, %arg3: memref<4x2x2x16x16xf32, #tpu.memory_space<vmem>>, %arg4: memref<2x2x16x32xf32, #tpu.memory_space<vmem>>) attributes {dimension_semantics = [#tpu.dimension_semantics<parallel>, #tpu.dimension_semantics<parallel>, #tpu.dimension_semantics<parallel>], iteration_bounds = array<i64: 1, 2, 1>, scalar_prefetch = 0 : i64, scratch_operands = 0 : i64, tpu.core_type = #tpu.core_type<tc>, window_params = [{transform_indices = @transform_0, window_bounds = array<i64: 4, 2, 2, 16, 16>}, {transform_indices = @transform_1, window_bounds = array<i64: 2, 2, 16, 32>}]} {
    %c0 = arith.constant 0 : index
    %c0_0 = arith.constant 0 : index
    %c0_1 = arith.constant 0 : index
    %c0_2 = arith.constant 0 : index
    %c0_3 = arith.constant 0 : index
    %0 = vector.load %arg3[%c0, %c0_0, %c0_1, %c0_2, %c0_3] : memref<4x2x2x16x16xf32, #tpu.memory_space<vmem>>, vector<1x2x2x16x8xf32>
    %1 = vector.shape_cast %0 : vector<1x2x2x16x8xf32> to vector<2x2x16x8xf32>
    %c3 = arith.constant 3 : index
    %c0_4 = arith.constant 0 : index
    %c0_5 = arith.constant 0 : index
    %c0_6 = arith.constant 0 : index
    %c8 = arith.constant 8 : index
    %2 = vector.load %arg3[%c3, %c0_4, %c0_5, %c0_6, %c8] : memref<4x2x2x16x16xf32, #tpu.memory_space<vmem>>, vector<1x2x2x16x8xf32>
    %3 = vector.shape_cast %2 : vector<1x2x2x16x8xf32> to vector<2x2x16x8xf32>
    %4 = arith.addf %1, %3 : vector<2x2x16x8xf32>
    %c0_7 = arith.constant 0 : index
    %c0_8 = arith.constant 0 : index
    %c0_9 = arith.constant 0 : index
    %c0_10 = arith.constant 0 : index
    %5 = vector.load %arg4[%c0_7, %c0_8, %c0_9, %c0_10] : memref<2x2x16x32xf32, #tpu.memory_space<vmem>>, vector<2x2x16x8xf32>
    tpu.vector_store %arg4[%c0_7, %c0_8, %c0_9, %c0_10], %4 {strides = array<i32>} : memref<2x2x16x32xf32, #tpu.memory_space<vmem>>, vector<2x2x16x8xf32>,
    %c1 = arith.constant 1 : index
    %c0_11 = arith.constant 0 : index
    %c0_12 = arith.constant 0 : index
    %c0_13 = arith.constant 0 : index
    %c0_14 = arith.constant 0 : index
    %6 = vector.load %arg3[%c1, %c0_11, %c0_12, %c0_13, %c0_14] : memref<4x2x2x16x16xf32, #tpu.memory_space<vmem>>, vector<1x2x2x16x8xf32>
    %7 = vector.shape_cast %6 : vector<1x2x2x16x8xf32> to vector<2x2x16x8xf32>
    %c0_15 = arith.constant 0 : index
    %c0_16 = arith.constant 0 : index
    %c0_17 = arith.constant 0 : index
    %c0_18 = arith.constant 0 : index
    %c8_19 = arith.constant 8 : index
    %8 = vector.load %arg3[%c0_15, %c0_16, %c0_17, %c0_18, %c8_19] : memref<4x2x2x16x16xf32, #tpu.memory_space<vmem>>, vector<1x2x2x16x8xf32>
    %9 = vector.shape_cast %8 : vector<1x2x2x16x8xf32> to vector<2x2x16x8xf32>
    %10 = arith.addf %7, %9 : vector<2x2x16x8xf32>
    %c0_20 = arith.constant 0 : index
    %c0_21 = arith.constant 0 : index
    %c0_22 = arith.constant 0 : index
    %c8_23 = arith.constant 8 : index
    %11 = vector.load %arg4[%c0_20, %c0_21, %c0_22, %c8_23] : memref<2x2x16x32xf32, #tpu.memory_space<vmem>>, vector<2x2x16x8xf32>
    tpu.vector_store %arg4[%c0_20, %c0_21, %c0_22, %c8_23], %10 {strides = array<i32>} : memref<2x2x16x32xf32, #tpu.memory_space<vmem>>, vector<2x2x16x8xf32>,
    %c2 = arith.constant 2 : index
    %c0_24 = arith.constant 0 : index
    %c0_25 = arith.constant 0 : index
    %c0_26 = arith.constant 0 : index
    %c0_27 = arith.constant 0 : index
    %12 = vector.load %arg3[%c2, %c0_24, %c0_25, %c0_26, %c0_27] : memref<4x2x2x16x16xf32, #tpu.memory_space<vmem>>, vector<1x2x2x16x8xf32>
    %13 = vector.shape_cast %12 : vector<1x2x2x16x8xf32> to vector<2x2x16x8xf32>
    %c1_28 = arith.constant 1 : index
    %c0_29 = arith.constant 0 : index
    %c0_30 = arith.constant 0 : index
    %c0_31 = arith.constant 0 : index
    %c8_32 = arith.constant 8 : index
    %14 = vector.load %arg3[%c1_28, %c0_29, %c0_30, %c0_31, %c8_32] : memref<4x2x2x16x16xf32, #tpu.memory_space<vmem>>, vector<1x2x2x16x8xf32>
    %15 = vector.shape_cast %14 : vector<1x2x2x16x8xf32> to vector<2x2x16x8xf32>
    %16 = arith.addf %13, %15 : vector<2x2x16x8xf32>
    %c0_33 = arith.constant 0 : index
    %c0_34 = arith.constant 0 : index
    %c0_35 = arith.constant 0 : index
    %c16 = arith.constant 16 : index
    %17 = vector.load %arg4[%c0_33, %c0_34, %c0_35, %c16] : memref<2x2x16x32xf32, #tpu.memory_space<vmem>>, vector<2x2x16x8xf32>
    tpu.vector_store %arg4[%c0_33, %c0_34, %c0_35, %c16], %16 {strides = array<i32>} : memref<2x2x16x32xf32, #tpu.memory_space<vmem>>, vector<2x2x16x8xf32>,
    %c3_36 = arith.constant 3 : index
    %c0_37 = arith.constant 0 : index
    %c0_38 = arith.constant 0 : index
    %c0_39 = arith.constant 0 : index
    %c0_40 = arith.constant 0 : index
    %18 = vector.load %arg3[%c3_36, %c0_37, %c0_38, %c0_39, %c0_40] : memref<4x2x2x16x16xf32, #tpu.memory_space<vmem>>, vector<1x2x2x16x8xf32>
    %19 = vector.shape_cast %18 : vector<1x2x2x16x8xf32> to vector<2x2x16x8xf32>
    %c2_41 = arith.constant 2 : index
    %c0_42 = arith.constant 0 : index
    %c0_43 = arith.constant 0 : index
    %c0_44 = arith.constant 0 : index
    %c8_45 = arith.constant 8 : index
    %20 = vector.load %arg3[%c2_41, %c0_42, %c0_43, %c0_44, %c8_45] : memref<4x2x2x16x16xf32, #tpu.memory_space<vmem>>, vector<1x2x2x16x8xf32>
    %21 = vector.shape_cast %20 : vector<1x2x2x16x8xf32> to vector<2x2x16x8xf32>
    %22 = arith.addf %19, %21 : vector<2x2x16x8xf32>
    %c0_46 = arith.constant 0 : index
    %c0_47 = arith.constant 0 : index
    %c0_48 = arith.constant 0 : index
    %c24 = arith.constant 24 : index
    %23 = vector.load %arg4[%c0_46, %c0_47, %c0_48, %c24] : memref<2x2x16x32xf32, #tpu.memory_space<vmem>>, vector<2x2x16x8xf32>
    tpu.vector_store %arg4[%c0_46, %c0_47, %c0_48, %c24], %22 {strides = array<i32>} : memref<2x2x16x32xf32, #tpu.memory_space<vmem>>, vector<2x2x16x8xf32>,
    return
  }
  func.func @transform_0(%arg0: i32, %arg1: i32, %arg2: i32) -> (i32, i32, i32, i32, i32) {
    %c0_i32 = arith.constant 0 : i32
    %c0_i32_0 = arith.constant 0 : i32
    %c0_i32_1 = arith.constant 0 : i32
    return %c0_i32, %arg0, %arg1, %arg2, %c0_i32_0 : i32, i32, i32, i32, i32
  }
  func.func @transform_1(%arg0: i32, %arg1: i32, %arg2: i32) -> (i32, i32, i32, i32) {
    %c0_i32 = arith.constant 0 : i32
    %c0_i32_0 = arith.constant 0 : i32
    return %arg0, %arg1, %arg2, %c0_i32 : i32, i32, i32, i32
  }
}

</mosaic_0001>

<llo_original>
// kernel: tpu_custom_call.1
$region0: #{tpu_custom_call.1}
  #allocation0 [shape = 'u32[]', space=smem, size = 0x4, offset = 0x4, fixed_abs, tag = 'smem constant byte address 0x4 - core index']
  #allocation1 [shape = 'u32[144,128]{1,0:T(1,128)}', space=vmem, size = 0x12000, scoped, tag = 'internal scratch']
  #allocation6 [shape = 's32[]', space=sflag, size = 0x4, offset = 0, fixed_abs, tag = 'sflag constant byte address 0x0 - dummy sync flag']
  #allocation8 [shape = 's32[]', space=sflag, size = 0x4, offset = 0, fixed_abs, tag = 'sflag constant byte address 0x0 - dummy sync flag']
  %s0 = inlined_call_operand.hbm [shape: f32[4,2,4,16,16], index: 0, kind: input, shape index: {}]
  %s1 = inlined_call_operand.hbm [shape: f32[2,4,16,32], index: 1, kind: output, shape index: {}]
  %s2 = sld [smem:[#allocation0]]
  $region41: #{tpu_custom_call.1} parent=0
    _
  %s4 = ssub.s32 1, %s2
  %s5 = scalar_select 0, %s4, %s2
  $region1: #{tpu_custom_call.1} parent=0
    #allocation2 [shape = 'u8[262144]{0}', space=vmem, size = 0x40000, scoped, tag = 'input window, operand 0']
    #allocation3 [shape = 's32[2]{0}', space=sflag, size = 0x8, scoped, tag = 'scoped memory for tpu_custom_call.1']
    #allocation4 [shape = 's32[2]{0}', space=sflag, size = 0x8, scoped, tag = 'scoped memory for tpu_custom_call.1']
    #allocation5 [shape = 'u8[65536]{0}', space=vmem, size = 0x10000, scoped, tag = 'output window, operand 0']
    %6 = vsyncpa [#allocation3], 0
    %s7 = scalar_lea.sflag [#allocation3], 1
    %8 = vsyncpa %s7, 0
    %9 = vsyncpa [#allocation4], 0
    %s10 = scalar_lea.sflag [#allocation4], 1
    %11 = vsyncpa %s10, 0
    loop: start=0, step=1, limit=4
    $region2: #{tpu_custom_call.1} parent=1 // loop_pre_header
      _
    $region3: #{tpu_custom_call.1} parent=1 // loop_header
      %s13 = sphi 0, %s17
      %p14 = scmp.ge.s32.totalorder %s13, 4
      %s20 = sphi 0, %s39
      %s21 = sphi 0, %s35
      %s22 = sphi 0, %s31
      %s23 = sphi 0, %s20
      %s24 = sphi 0, %s21
      %s25 = sphi 0, %s22
      %s26 = sphi 0, %s23
      %s27 = sphi 0, %s24
      %s28 = sphi 0, %s25
      %s46 = sphi 0, %s48
      %s49 = sphi 0, %s46
      %s50 = sphi 0, %s49
      %s66 = sphi 0, %s50
      %s76 = sphi 0, %s78
      %s79 = sphi 0, %s76
      %s80 = sphi 0, %s79
      %s96 = sphi 0, %s80
    $region4: #{tpu_custom_call.1} parent=1 // loop_header_branch
      %16 = sbr.rel (%p14) target = $region8
    $region5: #{tpu_custom_call.1} parent=1 // loop_body
      %s18 = ssub.s32 %s13, 1
      %s19 = ssub.s32 %s13, 2
      %s29 = sadd.s32 1, %s22
      %p30 = scmp.ge.s32.totalorder %s29, 1
      %s31 = scalar_select %p30, 0, %s29
      %s32 = sadd.s32 1, %s21
      %s33 = scalar_select %p30, %s32, %s21
      %p34 = scmp.ge.s32.totalorder %s33, 2
      %s35 = scalar_select %p34, 0, %s33
      %s36 = sadd.s32 1, %s20
      %s37 = scalar_select %p34, %s36, %s20
      %p38 = scmp.ge.s32.totalorder %s37, 1
      %s39 = scalar_select %p38, 0, %s37
      %s40 = ssub.s32 %s20, %s39
      %s41 = ssub.s32 %s21, %s35
      %s42 = sor.u32 %s40, %s41
      %s43 = ssub.s32 %s22, %s31
      %s44 = sor.u32 %s42, %s43
      %p45 = scmp.eq.s32.totalorder %s44, 0
      %s47 = sadd.s32 %s46, 1
      %s48 = scalar_select %p45, %s46, %s47
      %p51 = pneg %p45
      %p52 = scmp.eq.s32.totalorder %s13, 1
      %p53 = por %p51, %p52
      %p54 = scmp.ne.s32.totalorder %s46, %s49
      %p55 = scmp.eq.s32.totalorder %s13, 0
      %p56 = por %p54, %p55
      %p57 = scmp.ne.s32.totalorder %s46, %s49
      %p58 = scmp.eq.s32.totalorder %s18, 1
      %p59 = por %p57, %p58
      %p60 = scmp.ne.s32.totalorder %s49, %s50
      %p61 = scmp.eq.s32.totalorder %s18, 0
      %p62 = por %p60, %p61
      %p63 = scmp.ne.s32.totalorder %s49, %s50
      %p64 = scmp.eq.s32.totalorder %s19, 1
      %p65 = por %p63, %p64
      %p67 = scmp.ne.s32.totalorder %s50, %s66
      %p68 = scmp.eq.s32.totalorder %s19, 0
      %p69 = por %p67, %p68
      %s70 = ssub.s32 %s20, %s39
      %s71 = ssub.s32 %s21, %s35
      %s72 = sor.u32 %s70, %s71
      %s73 = ssub.s32 %s22, %s31
      %s74 = sor.u32 %s72, %s73
      %p75 = scmp.eq.s32.totalorder %s74, 0
      %s77 = sadd.s32 %s76, 1
      %s78 = scalar_select %p75, %s76, %s77
      %p81 = pneg %p75
      %p82 = scmp.eq.s32.totalorder %s13, 1
      %p83 = por %p81, %p82
      %p84 = scmp.ne.s32.totalorder %s76, %s79
      %p85 = scmp.eq.s32.totalorder %s13, 0
      %p86 = por %p84, %p85
      %p87 = scmp.ne.s32.totalorder %s76, %s79
      %p88 = scmp.eq.s32.totalorder %s18, 1
      %p89 = por %p87, %p88
      %p90 = scmp.ne.s32.totalorder %s79, %s80
      %p91 = scmp.eq.s32.totalorder %s18, 0
      %p92 = por %p90, %p91
      %p93 = scmp.ne.s32.totalorder %s79, %s80
      %p94 = scmp.eq.s32.totalorder %s19, 1
      %p95 = por %p93, %p94
      %p97 = scmp.ne.s32.totalorder %s80, %s96
      %p98 = scmp.eq.s32.totalorder %s19, 0
      %p99 = por %p97, %p98
      %p100 = scmp.le.s32.totalorder 1, %s13
      %p101 = scmp.lt.s32.totalorder %s13, 3
      %p102 = pnand %p100, %p101
      %p103 = pneg %p102
      // Predicated region
      $region9: #{tpu_custom_call.1} parent=5 // pred_check
        _
      $region10: #{tpu_custom_call.1} parent=5 // pred_check_branch
        %105 = sbr.rel (%p102) target = $region12
      $region11: #{tpu_custom_call.1} parent=5 // pred_region
        %s106 = ssub.s32 %s13, 1
      $region12: #{tpu_custom_call.1} parent=5 // pred_fallthru
        _
      %p107 = scmp.lt.s32.totalorder %s13, 2
      // Predicated region
      $region13: #{tpu_custom_call.1} parent=5 // pred_check
        %p108 = pneg %p107
      $region14: #{tpu_custom_call.1} parent=5 // pred_check_branch
        %110 = sbr.rel (%p108) target = $region16
      $region15: #{tpu_custom_call.1} parent=5 // pred_region
        // Predicated region
        $region17: #{tpu_custom_call.1} parent=15 // pred_check
          %p111 = pneg %p56
        $region18: #{tpu_custom_call.1} parent=15 // pred_check_branch
          %113 = sbr.rel (%p111) target = $region20
        $region19: #{tpu_custom_call.1} parent=15 // pred_region
          #allocation7 [shape = 'u32[6]{0}', space=smem, size = 0x18, scoped, tag = 'DMA stride descriptor']
          %s114 = sand.u32 %s46, 1
          %s115 = scalar_lea.sflag [#allocation3], %s114
          %s116 = sand.u32 %s46, 1
          %s117 = smul.addr %s116, 256
          %s118 = scalar_lea.vmem [#allocation2], %s117
          %s119 = smul.u32 2, %s20
          %s120 = smul.u32 2, %s21
          %s121 = smul.u32 2, %s22
          %s123 = ssub.s32 4096, 4096
          %124 = vsyncadd %s115, %s123
          %s125 = smul.addr %s120, 2
          %s126 = sadd.s32 %s121, %s125
          %s127 = smul.addr %s119, 8
          %s128 = sadd.s32 %s126, %s127
          %s129 = smul.addr %s128, 128
          %s130 = scalar_lea.hbm %s0, %s129
          %s132 = sshll.u32 1, 14
          %s133 = sxor.u32 4294967295, %s132
          %s135 = sld [smem:[#allocation0]]
          %s136 = sadd.s32 2, %s135
          %s138 = sshll.u32 7, 26
          %s139 = sxor.u32 4294967295, %s138
          %s140 = sand.u32 0, %s139
          %s141 = sshll.u32 %s136, 26
          %s142 = sor.u32 %s140, %s141
          %s143 = sshll.u32 %s118, 4
          %s144 = int_to_ptr.vmem [resolvable:$true] %s143
          %150 = sst [smem:[#allocation7]] 1024
          %s151 = scalar_lea.smem [#allocation7], 1
          %152 = sst [smem:[%s151]] 512
          %s153 = scalar_lea.smem [#allocation7], 2
          %154 = sst [smem:[%s153]] 4
          %s155 = scalar_lea.smem [#allocation7], 3
          %156 = sst [smem:[%s155]] 128
          %s157 = scalar_lea.smem [#allocation7], 4
          %158 = sst [smem:[%s157]] 128
          %s159 = scalar_lea.smem [#allocation7], 5
          %160 = sst [smem:[%s159]] 8
          %162 = dma.general %s130, 4096, %s144, %s115, [#allocation6], [#allocation7], %s142, 0
        $region20: #{tpu_custom_call.1} parent=15 // pred_fallthru
          _
      $region16: #{tpu_custom_call.1} parent=5 // pred_fallthru
        _
      %p163 = scmp.le.s32.totalorder 1, %s13
      %p164 = scmp.lt.s32.totalorder %s13, 3
      %p165 = pnand %p163, %p164
      %p166 = pneg %p165
      // Predicated region
      $region21: #{tpu_custom_call.1} parent=5 // pred_check
        _
      $region22: #{tpu_custom_call.1} parent=5 // pred_check_branch
        %168 = sbr.rel (%p165) target = $region24
      $region23: #{tpu_custom_call.1} parent=5 // pred_region
        %s169 = ssub.s32 %s13, 1
        %s170 = sand.u32 %s49, 1
        %s171 = scalar_lea.sflag [#allocation3], %s170
        %s172 = sand.u32 %s49, 1
        %s173 = smul.addr %s172, 256
        %s174 = scalar_lea.vmem [#allocation2], %s173
        // Predicated region
        $region25: #{tpu_custom_call.1} parent=23 // pred_check
          %p175 = pneg %p62
        $region26: #{tpu_custom_call.1} parent=23 // pred_check_branch
          %177 = sbr.rel (%p175) target = $region28
        $region27: #{tpu_custom_call.1} parent=23 // pred_region
          %178 = dma.done %s171, 4096
        $region28: #{tpu_custom_call.1} parent=23 // pred_fallthru
          _
        %s179 = sand.u32 %s49, 1
        %s180 = scalar_lea.sflag [#allocation3], %s179
        %s181 = sand.u32 %s49, 1
        %s182 = smul.addr %s181, 256
        %s183 = scalar_lea.vmem [#allocation2], %s182
        %p184 = pneg %p62
        %p185 = pneg %p59
        %p186 = pneg %p92
        %p187 = pneg %p89
        %s188 = sand.u32 %s79, 1
        %s189 = scalar_lea.sflag [#allocation4], %s188
        %s190 = sand.u32 %s79, 1
        %s191 = smul.addr %s190, 64
        %s192 = scalar_lea.vmem [#allocation5], %s191
        %s193 = smul.u32 2, %s23
        %s194 = smul.u32 2, %s24
        %s195 = smul.u32 2, %s25
        %s196 = smul.u32 2, %s23
        %s197 = smul.u32 2, %s24
        %s198 = smul.u32 2, %s25
        %v199 = vld [vmem:[%s174] sm:$0xff]
        %v200 = vld [vmem:[%s174 + $0x8] sm:$0xff]
        %v201 = vld [vmem:[%s174 + $0x10] sm:$0xff]
        %v202 = vld [vmem:[%s174 + $0x18] sm:$0xff]
        %v203 = vld [vmem:[%s174 + $0x20] sm:$0xff]
        %v204 = vld [vmem:[%s174 + $0x28] sm:$0xff]
        %v205 = vld [vmem:[%s174 + $0x30] sm:$0xff]
        %v206 = vld [vmem:[%s174 + $0x38] sm:$0xff]
        %s207 = scalar_lea.vmem %s174, 192 [#allocation2]
        %v208 = vld [vmem:[%s207] sm:$0xff]
        %v209 = vld [vmem:[%s207 + $0x8] sm:$0xff]
        %v210 = vld [vmem:[%s207 + $0x10] sm:$0xff]
        %v211 = vld [vmem:[%s207 + $0x18] sm:$0xff]
        %v212 = vld [vmem:[%s207 + $0x20] sm:$0xff]
        %v213 = vld [vmem:[%s207 + $0x28] sm:$0xff]
        %v214 = vld [vmem:[%s207 + $0x30] sm:$0xff]
        %v215 = vld [vmem:[%s207 + $0x38] sm:$0xff]
        %224 = vrot.lane.b32.xlu0 %v208, 120
        %v225 = vpop.permute.xlu0 %224
        %226 = vrot.lane.b32.xlu0 %v209, 120
        %v227 = vpop.permute.xlu0 %226
        %228 = vrot.lane.b32.xlu0 %v210, 120
        %v229 = vpop.permute.xlu0 %228
        %230 = vrot.lane.b32.xlu0 %v211, 120
        %v231 = vpop.permute.xlu0 %230
        %232 = vrot.lane.b32.xlu0 %v212, 120
        %v233 = vpop.permute.xlu0 %232
        %234 = vrot.lane.b32.xlu0 %v213, 120
        %v235 = vpop.permute.xlu0 %234
        %236 = vrot.lane.b32.xlu0 %v214, 120
        %v237 = vpop.permute.xlu0 %236
        %238 = vrot.lane.b32.xlu0 %v215, 120
        %v239 = vpop.permute.xlu0 %238
        %v248 = vadd.f32 %v199, %v225
        %v249 = vadd.f32 %v200, %v227
        %v250 = vadd.f32 %v201, %v229
        %v251 = vadd.f32 %v202, %v231
        %v252 = vadd.f32 %v203, %v233
        %v253 = vadd.f32 %v204, %v235
        %v254 = vadd.f32 %v205, %v237
        %v255 = vadd.f32 %v206, %v239
        %vm256 = vcmask 64512
        %257 = vst.msk [vmem:[%s192] sm:$0xff] %vm256, %v248
        %258 = vst.msk [vmem:[%s192 + $0x8] sm:$0xff] %vm256, %v249
        %259 = vst.msk [vmem:[%s192 + $0x10] sm:$0xff] %vm256, %v250
        %260 = vst.msk [vmem:[%s192 + $0x18] sm:$0xff] %vm256, %v251
        %261 = vst.msk [vmem:[%s192 + $0x20] sm:$0xff] %vm256, %v252
        %262 = vst.msk [vmem:[%s192 + $0x28] sm:$0xff] %vm256, %v253
        %263 = vst.msk [vmem:[%s192 + $0x30] sm:$0xff] %vm256, %v254
        %264 = vst.msk [vmem:[%s192 + $0x38] sm:$0xff] %vm256, %v255
        %s265 = scalar_lea.vmem %s174, 64 [#allocation2]
        %v266 = vld [vmem:[%s265] sm:$0xff]
        %v267 = vld [vmem:[%s265 + $0x8] sm:$0xff]
        %v268 = vld [vmem:[%s265 + $0x10] sm:$0xff]
        %v269 = vld [vmem:[%s265 + $0x18] sm:$0xff]
        %v270 = vld [vmem:[%s265 + $0x20] sm:$0xff]
        %v271 = vld [vmem:[%s265 + $0x28] sm:$0xff]
        %v272 = vld [vmem:[%s265 + $0x30] sm:$0xff]
        %v273 = vld [vmem:[%s265 + $0x38] sm:$0xff]
        %v274 = vld [vmem:[%s174] sm:$0xff]
        %v275 = vld [vmem:[%s174 + $0x8] sm:$0xff]
        %v276 = vld [vmem:[%s174 + $0x10] sm:$0xff]
        %v277 = vld [vmem:[%s174 + $0x18] sm:$0xff]
        %v278 = vld [vmem:[%s174 + $0x20] sm:$0xff]
        %v279 = vld [vmem:[%s174 + $0x28] sm:$0xff]
        %v280 = vld [vmem:[%s174 + $0x30] sm:$0xff]
        %v281 = vld [vmem:[%s174 + $0x38] sm:$0xff]
        %290 = vrot.lane.b32.xlu0 %v274, 120
        %v291 = vpop.permute.xlu0 %290
        %292 = vrot.lane.b32.xlu0 %v275, 120
        %v293 = vpop.permute.xlu0 %292
        %294 = vrot.lane.b32.xlu0 %v276, 120
        %v295 = vpop.permute.xlu0 %294
        %296 = vrot.lane.b32.xlu0 %v277, 120
        %v297 = vpop.permute.xlu0 %296
        %298 = vrot.lane.b32.xlu0 %v278, 120
        %v299 = vpop.permute.xlu0 %298
        %300 = vrot.lane.b32.xlu0 %v279, 120
        %v301 = vpop.permute.xlu0 %300
        %302 = vrot.lane.b32.xlu0 %v280, 120
        %v303 = vpop.permute.xlu0 %302
        %304 = vrot.lane.b32.xlu0 %v281, 120
        %v305 = vpop.permute.xlu0 %304
        %v314 = vadd.f32 %v266, %v291
        %v315 = vadd.f32 %v267, %v293
        %v316 = vadd.f32 %v268, %v295
        %v317 = vadd.f32 %v269, %v297
        %v318 = vadd.f32 %v270, %v299
        %v319 = vadd.f32 %v271, %v301
        %v320 = vadd.f32 %v272, %v303
        %v321 = vadd.f32 %v273, %v305
        %330 = vrot.lane.b32.xlu0 %v314, 8
        %v331 = vpop.permute.xlu0 %330
        %332 = vrot.lane.b32.xlu0 %v315, 8
        %v333 = vpop.permute.xlu0 %332
        %334 = vrot.lane.b32.xlu0 %v316, 8
        %v335 = vpop.permute.xlu0 %334
        %336 = vrot.lane.b32.xlu0 %v317, 8
        %v337 = vpop.permute.xlu0 %336
        %338 = vrot.lane.b32.xlu0 %v318, 8
        %v339 = vpop.permute.xlu0 %338
        %340 = vrot.lane.b32.xlu0 %v319, 8
        %v341 = vpop.permute.xlu0 %340
        %342 = vrot.lane.b32.xlu0 %v320, 8
        %v343 = vpop.permute.xlu0 %342
        %344 = vrot.lane.b32.xlu0 %v321, 8
        %v345 = vpop.permute.xlu0 %344
        %vm354 = vcmask 130112
        %355 = vst.msk [vmem:[%s192] sm:$0xff] %vm354, %v331
        %356 = vst.msk [vmem:[%s192 + $0x8] sm:$0xff] %vm354, %v333
        %357 = vst.msk [vmem:[%s192 + $0x10] sm:$0xff] %vm354, %v335
        %358 = vst.msk [vmem:[%s192 + $0x18] sm:$0xff] %vm354, %v337
        %359 = vst.msk [vmem:[%s192 + $0x20] sm:$0xff] %vm354, %v339
        %360 = vst.msk [vmem:[%s192 + $0x28] sm:$0xff] %vm354, %v341
        %361 = vst.msk [vmem:[%s192 + $0x30] sm:$0xff] %vm354, %v343
        %362 = vst.msk [vmem:[%s192 + $0x38] sm:$0xff] %vm354, %v345
        %s363 = scalar_lea.vmem %s174, 128 [#allocation2]
        %v364 = vld [vmem:[%s363] sm:$0xff]
        %v365 = vld [vmem:[%s363 + $0x8] sm:$0xff]
        %v366 = vld [vmem:[%s363 + $0x10] sm:$0xff]
        %v367 = vld [vmem:[%s363 + $0x18] sm:$0xff]
        %v368 = vld [vmem:[%s363 + $0x20] sm:$0xff]
        %v369 = vld [vmem:[%s363 + $0x28] sm:$0xff]
        %v370 = vld [vmem:[%s363 + $0x30] sm:$0xff]
        %v371 = vld [vmem:[%s363 + $0x38] sm:$0xff]
        %v372 = vld [vmem:[%s265] sm:$0xff]
        %v373 = vld [vmem:[%s265 + $0x8] sm:$0xff]
        %v374 = vld [vmem:[%s265 + $0x10] sm:$0xff]
        %v375 = vld [vmem:[%s265 + $0x18] sm:$0xff]
        %v376 = vld [vmem:[%s265 + $0x20] sm:$0xff]
        %v377 = vld [vmem:[%s265 + $0x28] sm:$0xff]
        %v378 = vld [vmem:[%s265 + $0x30] sm:$0xff]
        %v379 = vld [vmem:[%s265 + $0x38] sm:$0xff]
        %388 = vrot.lane.b32.xlu0 %v372, 120
        %v389 = vpop.permute.xlu0 %388
        %390 = vrot.lane.b32.xlu0 %v373, 120
        %v391 = vpop.permute.xlu0 %390
        %392 = vrot.lane.b32.xlu0 %v374, 120
        %v393 = vpop.permute.xlu0 %392
        %394 = vrot.lane.b32.xlu0 %v375, 120
        %v395 = vpop.permute.xlu0 %394
        %396 = vrot.lane.b32.xlu0 %v376, 120
        %v397 = vpop.permute.xlu0 %396
        %398 = vrot.lane.b32.xlu0 %v377, 120
        %v399 = vpop.permute.xlu0 %398
        %400 = vrot.lane.b32.xlu0 %v378, 120
        %v401 = vpop.permute.xlu0 %400
        %402 = vrot.lane.b32.xlu0 %v379, 120
        %v403 = vpop.permute.xlu0 %402
        %v412 = vadd.f32 %v364, %v389
        %v413 = vadd.f32 %v365, %v391
        %v414 = vadd.f32 %v366, %v393
        %v415 = vadd.f32 %v367, %v395
        %v416 = vadd.f32 %v368, %v397
        %v417 = vadd.f32 %v369, %v399
        %v418 = vadd.f32 %v370, %v401
        %v419 = vadd.f32 %v371, %v403
        %428 = vrot.lane.b32.xlu0 %v412, 16
        %v429 = vpop.permute.xlu0 %428
        %430 = vrot.lane.b32.xlu0 %v413, 16
        %v431 = vpop.permute.xlu0 %430
        %432 = vrot.lane.b32.xlu0 %v414, 16
        %v433 = vpop.permute.xlu0 %432
        %434 = vrot.lane.b32.xlu0 %v415, 16
        %v435 = vpop.permute.xlu0 %434
        %436 = vrot.lane.b32.xlu0 %v416, 16
        %v437 = vpop.permute.xlu0 %436
        %438 = vrot.lane.b32.xlu0 %v417, 16
        %v439 = vpop.permute.xlu0 %438
        %440 = vrot.lane.b32.xlu0 %v418, 16
        %v441 = vpop.permute.xlu0 %440
        %442 = vrot.lane.b32.xlu0 %v419, 16
        %v443 = vpop.permute.xlu0 %442
        %vm452 = vcmask 195712
        %453 = vst.msk [vmem:[%s192] sm:$0xff] %vm452, %v429
        %454 = vst.msk [vmem:[%s192 + $0x8] sm:$0xff] %vm452, %v431
        %455 = vst.msk [vmem:[%s192 + $0x10] sm:$0xff] %vm452, %v433
        %456 = vst.msk [vmem:[%s192 + $0x18] sm:$0xff] %vm452, %v435
        %457 = vst.msk [vmem:[%s192 + $0x20] sm:$0xff] %vm452, %v437
        %458 = vst.msk [vmem:[%s192 + $0x28] sm:$0xff] %vm452, %v439
        %459 = vst.msk [vmem:[%s192 + $0x30] sm:$0xff] %vm452, %v441
        %460 = vst.msk [vmem:[%s192 + $0x38] sm:$0xff] %vm452, %v443
        %v461 = vld [vmem:[%s207] sm:$0xff]
        %v462 = vld [vmem:[%s207 + $0x8] sm:$0xff]
        %v463 = vld [vmem:[%s207 + $0x10] sm:$0xff]
        %v464 = vld [vmem:[%s207 + $0x18] sm:$0xff]
        %v465 = vld [vmem:[%s207 + $0x20] sm:$0xff]
        %v466 = vld [vmem:[%s207 + $0x28] sm:$0xff]
        %v467 = vld [vmem:[%s207 + $0x30] sm:$0xff]
        %v468 = vld [vmem:[%s207 + $0x38] sm:$0xff]
        %v469 = vld [vmem:[%s363] sm:$0xff]
        %v470 = vld [vmem:[%s363 + $0x8] sm:$0xff]
        %v471 = vld [vmem:[%s363 + $0x10] sm:$0xff]
        %v472 = vld [vmem:[%s363 + $0x18] sm:$0xff]
        %v473 = vld [vmem:[%s363 + $0x20] sm:$0xff]
        %v474 = vld [vmem:[%s363 + $0x28] sm:$0xff]
        %v475 = vld [vmem:[%s363 + $0x30] sm:$0xff]
        %v476 = vld [vmem:[%s363 + $0x38] sm:$0xff]
        %485 = vrot.lane.b32.xlu0 %v469, 120
        %v486 = vpop.permute.xlu0 %485
        %487 = vrot.lane.b32.xlu0 %v470, 120
        %v488 = vpop.permute.xlu0 %487
        %489 = vrot.lane.b32.xlu0 %v471, 120
        %v490 = vpop.permute.xlu0 %489
        %491 = vrot.lane.b32.xlu0 %v472, 120
        %v492 = vpop.permute.xlu0 %491
        %493 = vrot.lane.b32.xlu0 %v473, 120
        %v494 = vpop.permute.xlu0 %493
        %495 = vrot.lane.b32.xlu0 %v474, 120
        %v496 = vpop.permute.xlu0 %495
        %497 = vrot.lane.b32.xlu0 %v475, 120
        %v498 = vpop.permute.xlu0 %497
        %499 = vrot.lane.b32.xlu0 %v476, 120
        %v500 = vpop.permute.xlu0 %499
        %v509 = vadd.f32 %v461, %v486
        %v510 = vadd.f32 %v462, %v488
        %v511 = vadd.f32 %v463, %v490
        %v512 = vadd.f32 %v464, %v492
        %v513 = vadd.f32 %v465, %v494
        %v514 = vadd.f32 %v466, %v496
        %v515 = vadd.f32 %v467, %v498
        %v516 = vadd.f32 %v468, %v500
        %525 = vrot.lane.b32.xlu0 %v509, 24
        %v526 = vpop.permute.xlu0 %525
        %527 = vrot.lane.b32.xlu0 %v510, 24
        %v528 = vpop.permute.xlu0 %527
        %529 = vrot.lane.b32.xlu0 %v511, 24
        %v530 = vpop.permute.xlu0 %529
        %531 = vrot.lane.b32.xlu0 %v512, 24
        %v532 = vpop.permute.xlu0 %531
        %533 = vrot.lane.b32.xlu0 %v513, 24
        %v534 = vpop.permute.xlu0 %533
        %535 = vrot.lane.b32.xlu0 %v514, 24
        %v536 = vpop.permute.xlu0 %535
        %537 = vrot.lane.b32.xlu0 %v515, 24
        %v538 = vpop.permute.xlu0 %537
        %539 = vrot.lane.b32.xlu0 %v516, 24
        %v540 = vpop.permute.xlu0 %539
        %vm549 = vcmask 261312
        %550 = vst.msk [vmem:[%s192] sm:$0xff] %vm549, %v526
        %551 = vst.msk [vmem:[%s192 + $0x8] sm:$0xff] %vm549, %v528
        %552 = vst.msk [vmem:[%s192 + $0x10] sm:$0xff] %vm549, %v530
        %553 = vst.msk [vmem:[%s192 + $0x18] sm:$0xff] %vm549, %v532
        %554 = vst.msk [vmem:[%s192 + $0x20] sm:$0xff] %vm549, %v534
        %555 = vst.msk [vmem:[%s192 + $0x28] sm:$0xff] %vm549, %v536
        %556 = vst.msk [vmem:[%s192 + $0x30] sm:$0xff] %vm549, %v538
        %557 = vst.msk [vmem:[%s192 + $0x38] sm:$0xff] %vm549, %v540
        %s558 = sand.u32 %s79, 1
        %s559 = scalar_lea.sflag [#allocation4], %s558
        %s560 = sand.u32 %s79, 1
        %s561 = smul.addr %s560, 64
        %s562 = scalar_lea.vmem [#allocation5], %s561
        // Predicated region
        $region29: #{tpu_custom_call.1} parent=23 // pred_check
          %p563 = pneg %p89
        $region30: #{tpu_custom_call.1} parent=23 // pred_check_branch
          %565 = sbr.rel (%p563) target = $region32
        $region31: #{tpu_custom_call.1} parent=23 // pred_region
          #allocation9 [shape = 'u32[6]{0}', space=smem, size = 0x18, scoped, tag = 'DMA stride descriptor']
          %s566 = smul.u32 2, %s23
          %s567 = smul.u32 2, %s24
          %s568 = smul.u32 2, %s25
          %s570 = ssub.s32 1024, 1024
          %571 = vsyncadd %s559, %s570
          %s572 = smul.addr %s567, 2
          %s573 = sadd.s32 %s568, %s572
          %s574 = smul.addr %s566, 8
          %s575 = sadd.s32 %s573, %s574
          %s576 = smul.addr %s575, 128
          %s577 = scalar_lea.hbm %s1, %s576
          %s579 = sshll.u32 1, 14
          %s580 = sxor.u32 4294967295, %s579
          %s583 = sshll.u32 7, 18
          %s584 = sxor.u32 4294967295, %s583
          %s585 = sand.u32 0, %s584
          %s587 = sor.u32 %s585, 0
          %s589 = sshll.u32 3, 24
          %s590 = sxor.u32 4294967295, %s589
          %s591 = sand.u32 %s587, %s590
          %s593 = sor.u32 %s591, 0
          %s594 = sshll.u32 %s562, 4
          %s595 = int_to_ptr.vmem [resolvable:$true] %s594
          %601 = sst [smem:[#allocation9]] 512
          %s602 = scalar_lea.smem [#allocation9], 1
          %603 = sst [smem:[%s602]] 1024
          %s604 = scalar_lea.smem [#allocation9], 2
          %605 = sst [smem:[%s604]] 4
          %s606 = scalar_lea.smem [#allocation9], 3
          %607 = sst [smem:[%s606]] 128
          %s608 = scalar_lea.smem [#allocation9], 4
          %609 = sst [smem:[%s608]] 128
          %s610 = scalar_lea.smem [#allocation9], 5
          %611 = sst [smem:[%s610]] 8
          %613 = dma.general %s595, 1024, %s577, %s559, [#allocation8], [#allocation9], %s593, 0
        $region32: #{tpu_custom_call.1} parent=23 // pred_fallthru
          _
      $region24: #{tpu_custom_call.1} parent=5 // pred_fallthru
        _
      %p614 = scmp.le.s32.totalorder 2, %s13
      // Predicated region
      $region33: #{tpu_custom_call.1} parent=5 // pred_check
        %p615 = pneg %p614
      $region34: #{tpu_custom_call.1} parent=5 // pred_check_branch
        %617 = sbr.rel (%p615) target = $region36
      $region35: #{tpu_custom_call.1} parent=5 // pred_region
        %s618 = ssub.s32 %s13, 2
        // Predicated region
        $region37: #{tpu_custom_call.1} parent=35 // pred_check
          %p619 = pneg %p95
        $region38: #{tpu_custom_call.1} parent=35 // pred_check_branch
          %621 = sbr.rel (%p619) target = $region40
        $region39: #{tpu_custom_call.1} parent=35 // pred_region
          %s622 = sand.u32 %s80, 1
          %s623 = scalar_lea.sflag [#allocation4], %s622
          %s624 = sand.u32 %s80, 1
          %s625 = smul.addr %s624, 64
          %s626 = scalar_lea.vmem [#allocation5], %s625
          %627 = dma.done %s623, 1024
        $region40: #{tpu_custom_call.1} parent=35 // pred_fallthru
          _
      $region36: #{tpu_custom_call.1} parent=5 // pred_fallthru
        _
    $region6: #{tpu_custom_call.1} parent=1 // loop_footer
      %s17 = sadd.s32 1, %s13
    $region7: #{tpu_custom_call.1} parent=1 // loop_footer_branch
      %12 = sbr.rel target = $region3
    $region8: #{tpu_custom_call.1} parent=1 // loop_exit
      _
    %628 = vsyncpa [#allocation3], 1
    %s629 = scalar_lea.sflag [#allocation3], 1
    %630 = vsyncpa %s629, 1
    %631 = vsyncpa [#allocation4], 1
    %s632 = scalar_lea.sflag [#allocation4], 1
    %633 = vsyncpa %s632, 1

</llo_original>
